<compile_context>
chip_gen: v7x
topology: tpu7x:2x2x1
jax: 0.10.0
libtpu: 0.0.40
codegen_flags: <defaults>
</compile_context>

<pallas_src>
import functools

import jax
import jax.numpy as jnp
from jax.experimental import pallas as pl
from jax.experimental.pallas import tpu as pltpu


def _num_tensorcores():
    """Best-effort detection of 2-TensorCore chips (v7x). Perf-only."""
    try:
        kind = jax.devices()[0].device_kind.lower()
    except Exception:
        return 1
    return 2 if ("v7" in kind or "7x" in kind) else 1


def _ai_mse_kernel(*refs, alpha_static, rows, tm, steps, num_blocks,
                   need_mask, inv_count, acc_rows):
    if alpha_static is None:
        alpha_ref, ys_ref, yt_ref, ygt_ref, phi_ref, out_ref, acc_ref = refs
        alpha = alpha_ref[0]
    else:
        ys_ref, yt_ref, ygt_ref, phi_ref, out_ref, acc_ref = refs
        alpha = jnp.float32(alpha_static)

    c = pl.program_id(0)
    i = pl.program_id(1)
    blk = c * steps + i

    @pl.when(i == 0)
    def _():
        acc_ref[...] = jnp.zeros_like(acc_ref)

    ys = ys_ref[...].astype(jnp.float32)
    d_t = ys - yt_ref[...].astype(jnp.float32)
    d_gt = ys - ygt_ref[...].astype(jnp.float32)
    phi = phi_ref[...].astype(jnp.float32)

    # Fused per-step weighting -> a single small accumulator.
    sq = alpha * (d_t * d_t) + (1.0 - alpha) * (phi * (d_gt * d_gt))

    def _fold(x):
        # (tm, L) -> (acc_rows, L): sum over leading groups (pure VPU adds;
        # reshape keeps 8-sublane groups intact so no relayout).
        if acc_rows == tm:
            return x
        return jnp.sum(x.reshape(tm // acc_rows, acc_rows, x.shape[-1]), axis=0)

    if need_mask:
        # Only the final (partial) block pays for the mask; jnp.where (not a
        # multiplicative mask) so garbage/NaN in the OOB rows cannot leak.
        @pl.when(blk == num_blocks - 1)
        def _():
            row_ids = blk * tm + jax.lax.broadcasted_iota(jnp.int32, sq.shape, 0)
            acc_ref[...] += _fold(jnp.where(row_ids < rows, sq, 0.0))

        @pl.when(blk < num_blocks - 1)
        def _():
            acc_ref[...] += _fold(sq)
    else:
        acc_ref[...] += _fold(sq)

    @pl.when(i == steps - 1)
    def _():
        partial = jnp.sum(acc_ref[...]) * inv_count
        out_ref[...] = jnp.full(out_ref.shape, partial, jnp.float32)


def ai_mse_loss(y_s, y_t, y_gt, phi, alpha, *, tm=1024, lane_width=512):
    """Weighted-MSE distillation loss (AI_MSELoss.forward) on TPU."""
    assert y_s.shape == y_t.shape == y_gt.shape == phi.shape
    total = y_s.size
    inv_count = 1.0 / float(total)

    # ---- lane-dense flatten: (rows, L), L a multiple of 128 -----------------
    L = None
    for cand in (lane_width, 1024, 512, 256, 128):
        if cand % 128 == 0 and total % cand == 0:
            L = cand
            break
    ops = [x.reshape(-1) for x in (y_s, y_t, y_gt, phi)]
    if L is None:
        # Only when total is not a multiple of 128: zero-pad the flat vectors
        # (zeros contribute exactly 0 to the weighted sum).
        L = 128
        pad = (-total) % L
        ops = [jnp.pad(x, (0, pad)) for x in ops]
    rows = ops[0].size // L
    ops = [x.reshape(rows, L) for x in ops]      # native dtype; cast in-kernel

    # ---- row tiling, rounded to the packed-sublane multiple -----------------
    req = 8
    for x in ops:
        isz = jnp.dtype(x.dtype).itemsize
        req = max(req, 8 * max(1, 4 // max(1, isz)))   # f32:8, bf16:16, 8-bit:32

    if rows <= tm:
        tm_eff = rows                                   # full extent is always legal
    else:
        tm_eff = max(req, (min(tm, rows) // req) * req)

    num_blocks = -(-rows // tm_eff)
    need_mask = (rows % tm_eff) != 0

    # Dual-TC split only when the chip has 2 TCs and the split is exact
    # (no redundant block refetch / duplicate finalize otherwise).
    ncores = _num_tensorcores()
    if not (ncores > 1 and num_blocks >= 2 and num_blocks % ncores == 0):
        ncores = 1
    steps = num_blocks // ncores

    acc_rows = 8 if (tm_eff >= 8 and tm_eff % 8 == 0) else tm_eff

    # ---- alpha: bake when static, SMEM otherwise -----------------------------
    alpha_static = None
    call_args = list(ops)
    in_specs = []
    if isinstance(alpha, (int, float)):
        alpha_static = float(alpha)
    else:
        alpha_arr = jnp.asarray(alpha, jnp.float32).reshape(1)
        call_args = [alpha_arr] + call_args
        in_specs.append(pl.BlockSpec(memory_space=pltpu.MemorySpace.SMEM))

    tile_spec = pl.BlockSpec((tm_eff, L), lambda c, i: (c * steps + i, 0))
    in_specs += [tile_spec] * 4                 # y_s, y_t, y_gt, phi

    kernel = functools.partial(
        _ai_mse_kernel, alpha_static=alpha_static, rows=rows, tm=tm_eff,
        steps=steps, num_blocks=num_blocks, need_mask=need_mask,
        inv_count=inv_count, acc_rows=acc_rows)

    bytes_in = sum(int(x.size) * jnp.dtype(x.dtype).itemsize for x in ops)
    cost = pl.CostEstimate(flops=7 * total, transcendentals=0,
                           bytes_accessed=bytes_in + 4 * 128 * ncores)

    out = pl.pallas_call(
        kernel,
        out_shape=jax.ShapeDtypeStruct((1, 128 * ncores), jnp.float32),
        grid_spec=pltpu.PrefetchScalarGridSpec(
            num_scalar_prefetch=0,
            grid=(ncores, steps),
            in_specs=in_specs,
            out_specs=pl.BlockSpec((1, 128), lambda c, i: (0, c)),
            scratch_shapes=[pltpu.VMEM((acc_rows, L), jnp.float32)],
        ),
        compiler_params=pltpu.CompilerParams(
            dimension_semantics=("parallel", "arbitrary"),
            vmem_limit_bytes=48 * 1024 * 1024),
        cost_estimate=cost,
    )(*call_args)

    # One partial loss per core (alpha already applied in-kernel).
    partials = out.reshape(ncores, 128)[:, 0]
    return jnp.sum(partials)


if __name__ == "__main__":
    key = jax.random.PRNGKey(0)
    k1, k2, k3, k4 = jax.random.split(key, 4)

    def ref_loss(y_s, y_t, y_gt, phi, alpha):
        y_s, y_t, y_gt, phi = (x.astype(jnp.float32) for x in (y_s, y_t, y_gt, phi))
        return jnp.mean(jnp.square(y_s - y_t) * alpha
                        + jnp.square(y_s - y_gt) * phi * (1.0 - alpha))

    # --- Test 1: module-sized f32 inputs, single full-extent tile ------------
    B, C, H, W = 2, 4, 16, 16
    y_s = jax.random.normal(k1, (B, C, H, W), jnp.float32)
    y_t = jax.random.normal(k2, (B, C, H, W), jnp.float32)
    y_gt = jax.random.normal(k3, (B, C, H, W), jnp.float32)
    phi = jax.random.uniform(k4, (B, C, H, W), jnp.float32)
    alpha = 0.7

    loss = jax.block_until_ready(ai_mse_loss(y_s, y_t, y_gt, phi, alpha))
    ref = ref_loss(y_s, y_t, y_gt, phi, alpha)
    assert jnp.allclose(loss, ref, rtol=1e-5, atol=1e-5), (loss, ref)

    # --- Test 2: multi-block grid with a partial (masked) tail block, f32 ----
    shape2 = (2, 4, 32, 40)   # 10240 elems -> rows=20 @ L=512; tm=16 -> tail of 4
    ka, kb, kc = jax.random.split(k1, 3)
    ys2 = jax.random.normal(ka, shape2, jnp.float32)
    yt2 = jax.random.normal(kb, shape2, jnp.float32)
    ygt2 = jax.random.normal(kc, shape2, jnp.float32)
    phi2 = jax.random.uniform(k4, shape2, jnp.float32)
    loss2 = jax.block_until_ready(ai_mse_loss(ys2, yt2, ygt2, phi2, 0.3, tm=16))
    ref2 = ref_loss(ys2, yt2, ygt2, phi2, 0.3)
    assert jnp.allclose(loss2, ref2, rtol=1e-5, atol=1e-5), (loss2, ref2)

    # --- Test 3: bf16 activations (HBM-bytes lever) + traced alpha (SMEM) ----
    ys3, yt3, ygt3 = (x.astype(jnp.bfloat16) for x in (ys2, yt2, ygt2))
    alpha3 = jnp.asarray(0.3, jnp.float32)
    loss3 = jax.block_until_ready(ai_mse_loss(ys3, yt3, ygt3, phi2, alpha3, tm=16))
    ref3 = ref_loss(ys3, yt3, ygt3, phi2, 0.3)
    assert jnp.allclose(loss3, ref3, rtol=1e-5, atol=1e-5), (loss3, ref3)

    print("KERNEL_OK")
</pallas_src>

<mosaic_0001>
module attributes {stable_mosaic.version = 11 : i64} {
  func.func @_ai_mse_kernel(%arg0: i32, %arg1: i32, %arg2: memref<4x512xf32, #tpu.memory_space<vmem>>, %arg3: memref<4x512xf32, #tpu.memory_space<vmem>>, %arg4: memref<4x512xf32, #tpu.memory_space<vmem>>, %arg5: memref<4x512xf32, #tpu.memory_space<vmem>>, %arg6: memref<1x128xf32, #tpu.memory_space<vmem>>, %arg7: memref<4x512xf32, #tpu.memory_space<vmem>>) attributes {dimension_semantics = [#tpu.dimension_semantics<parallel>, #tpu.dimension_semantics<arbitrary>], iteration_bounds = array<i64: 1, 1>, scalar_prefetch = 0 : i64, scratch_operands = 1 : i64, tpu.core_type = #tpu.core_type<tc>, window_params = [{transform_indices = @transform_0, window_bounds = array<i64: 4, 512>}, {transform_indices = @transform_1, window_bounds = array<i64: 4, 512>}, {transform_indices = @transform_2, window_bounds = array<i64: 4, 512>}, {transform_indices = @transform_3, window_bounds = array<i64: 4, 512>}, {transform_indices = @transform_4, window_bounds = array<i64: 1, 128>}]} {
    %c0_i32 = arith.constant 0 : i32
    %0 = arith.cmpi eq, %arg1, %c0_i32 : i32
    %1 = arith.extui %0 : i1 to i32
    %c0_i32_0 = arith.constant 0 : i32
    %2 = arith.cmpi ne, %1, %c0_i32_0 : i32
    scf.if %2 {
      %cst_16 = arith.constant 0.000000e+00 : f32
      %24 = vector.broadcast %cst_16 : f32 to vector<4x512xf32>
      %c0_17 = arith.constant 0 : index
      %c0_18 = arith.constant 0 : index
      %25 = vector.load %arg7[%c0_17, %c0_18] : memref<4x512xf32, #tpu.memory_space<vmem>>, vector<4x512xf32>
      tpu.vector_store %arg7[%c0_17, %c0_18], %24 {strides = array<i32>} : memref<4x512xf32, #tpu.memory_space<vmem>>, vector<4x512xf32>,
    } else {
    }
    %c0 = arith.constant 0 : index
    %c0_1 = arith.constant 0 : index
    %3 = vector.load %arg2[%c0, %c0_1] : memref<4x512xf32, #tpu.memory_space<vmem>>, vector<4x512xf32>
    %c0_2 = arith.constant 0 : index
    %c0_3 = arith.constant 0 : index
    %4 = vector.load %arg3[%c0_2, %c0_3] : memref<4x512xf32, #tpu.memory_space<vmem>>, vector<4x512xf32>
    %5 = arith.subf %3, %4 : vector<4x512xf32>
    %c0_4 = arith.constant 0 : index
    %c0_5 = arith.constant 0 : index
    %6 = vector.load %arg4[%c0_4, %c0_5] : memref<4x512xf32, #tpu.memory_space<vmem>>, vector<4x512xf32>
    %7 = arith.subf %3, %6 : vector<4x512xf32>
    %c0_6 = arith.constant 0 : index
    %c0_7 = arith.constant 0 : index
    %8 = vector.load %arg5[%c0_6, %c0_7] : memref<4x512xf32, #tpu.memory_space<vmem>>, vector<4x512xf32>
    %9 = arith.mulf %5, %5 : vector<4x512xf32>
    %cst = arith.constant 0.699999988 : f32
    %10 = vector.broadcast %cst : f32 to vector<4x512xf32>
    %11 = arith.mulf %10, %9 : vector<4x512xf32>
    %cst_8 = arith.constant 1.000000e+00 : f32
    %cst_9 = arith.constant 0.699999988 : f32
    %12 = arith.subf %cst_8, %cst_9 : f32
    %13 = arith.mulf %7, %7 : vector<4x512xf32>
    %14 = arith.mulf %8, %13 : vector<4x512xf32>
    %15 = vector.broadcast %12 : f32 to vector<4x512xf32>
    %16 = arith.mulf %15, %14 : vector<4x512xf32>
    %17 = arith.addf %11, %16 : vector<4x512xf32>
    %c0_10 = arith.constant 0 : index
    %c0_11 = arith.constant 0 : index
    %18 = vector.load %arg7[%c0_10, %c0_11] : memref<4x512xf32, #tpu.memory_space<vmem>>, vector<4x512xf32>
    %19 = arith.addf %18, %17 : vector<4x512xf32>
    %c0_12 = arith.constant 0 : index
    %c0_13 = arith.constant 0 : index
    %20 = vector.load %arg7[%c0_12, %c0_13] : memref<4x512xf32, #tpu.memory_space<vmem>>, vector<4x512xf32>
    tpu.vector_store %arg7[%c0_12, %c0_13], %19 {strides = array<i32>} : memref<4x512xf32, #tpu.memory_space<vmem>>, vector<4x512xf32>,
    %c0_i32_14 = arith.constant 0 : i32
    %21 = arith.cmpi eq, %arg1, %c0_i32_14 : i32
    %22 = arith.extui %21 : i1 to i32
    %c0_i32_15 = arith.constant 0 : i32
    %23 = arith.cmpi ne, %22, %c0_i32_15 : i32
    scf.if %23 {
      %c0_16 = arith.constant 0 : index
      %c0_17 = arith.constant 0 : index
      %24 = vector.load %arg7[%c0_16, %c0_17] : memref<4x512xf32, #tpu.memory_space<vmem>>, vector<4x512xf32>
      %25 = vector.shape_cast %24 : vector<4x512xf32> to vector<1x4x512xf32>
      %cst_18 = arith.constant dense<0.000000e+00> : vector<1xf32>
      %26 = vector.multi_reduction <add>, %25, %cst_18 [1, 2] : vector<1x4x512xf32> to vector<1xf32>
      %27 = vector.shape_cast %26 : vector<1xf32> to vector<1x1x1xf32>
      %28 = vector.extract %27[0, 0, 0] : f32 from vector<1x1x1xf32>
      %cst_19 = arith.constant 4.8828125E-4 : f32
      %29 = arith.mulf %28, %cst_19 : f32
      %30 = vector.broadcast %29 : f32 to vector<1x128xf32>
      %c0_20 = arith.constant 0 : index
      %c0_21 = arith.constant 0 : index
      %31 = vector.load %arg6[%c0_20, %c0_21] : memref<1x128xf32, #tpu.memory_space<vmem>>, vector<1x128xf32>
      tpu.vector_store %arg6[%c0_20, %c0_21], %30 {strides = array<i32>} : memref<1x128xf32, #tpu.memory_space<vmem>>, vector<1x128xf32>,
    } else {
    }
    return
  }
  func.func @transform_0(%arg0: i32, %arg1: i32) -> (i32, i32) {
    %c1_i32 = arith.constant 1 : i32
    %0 = arith.muli %arg0, %c1_i32 : i32
    %1 = arith.addi %0, %arg1 : i32
    %c0_i32 = arith.constant 0 : i32
    %c0_i32_0 = arith.constant 0 : i32
    return %1, %c0_i32 : i32, i32
  }
  func.func @transform_1(%arg0: i32, %arg1: i32) -> (i32, i32) {
    %c1_i32 = arith.constant 1 : i32
    %0 = arith.muli %arg0, %c1_i32 : i32
    %1 = arith.addi %0, %arg1 : i32
    %c0_i32 = arith.constant 0 : i32
    %c0_i32_0 = arith.constant 0 : i32
    return %1, %c0_i32 : i32, i32
  }
  func.func @transform_2(%arg0: i32, %arg1: i32) -> (i32, i32) {
    %c1_i32 = arith.constant 1 : i32
    %0 = arith.muli %arg0, %c1_i32 : i32
    %1 = arith.addi %0, %arg1 : i32
    %c0_i32 = arith.constant 0 : i32
    %c0_i32_0 = arith.constant 0 : i32
    return %1, %c0_i32 : i32, i32
  }
  func.func @transform_3(%arg0: i32, %arg1: i32) -> (i32, i32) {
    %c1_i32 = arith.constant 1 : i32
    %0 = arith.muli %arg0, %c1_i32 : i32
    %1 = arith.addi %0, %arg1 : i32
    %c0_i32 = arith.constant 0 : i32
    %c0_i32_0 = arith.constant 0 : i32
    return %1, %c0_i32 : i32, i32
  }
  func.func @transform_4(%arg0: i32, %arg1: i32) -> (i32, i32) {
    %c0_i32 = arith.constant 0 : i32
    %c0_i32_0 = arith.constant 0 : i32
    return %c0_i32, %arg0 : i32, i32
  }
}

</mosaic_0001>

<llo_original>
// kernel: tpu_custom_call.1
$region0: #{tpu_custom_call.1}
  #allocation0 [shape = 'u32[]', space=smem, size = 0x4, offset = 0x4, fixed_abs, tag = 'smem constant byte address 0x4 - core index']
  #allocation1 [shape = 'u32[144,128]{1,0:T(1,128)}', space=vmem, size = 0x12000, scoped, tag = 'internal scratch']
  #allocation2 [shape = 'f32[4,512]{1,0:T(4,128)}', space=vmem, size = 0x2000, scoped, tag = 'scratch operand']
  %s0 = inlined_call_operand.hbm [shape: f32[4,512], index: 0, kind: input, shape index: {}]
  %s1 = inlined_call_operand.hbm [shape: f32[4,512], index: 1, kind: input, shape index: {}]
  %s2 = inlined_call_operand.hbm [shape: f32[4,512], index: 2, kind: input, shape index: {}]
  %s3 = inlined_call_operand.hbm [shape: f32[4,512], index: 3, kind: input, shape index: {}]
  %s4 = inlined_call_operand.hbm [shape: f32[1,128], index: 4, kind: output, shape index: {}]
  %s5 = sld [smem:[#allocation0]]
  $region50: #{tpu_custom_call.1} parent=0
    _
  %s7 = ssub.s32 1, %s5
  %s8 = scalar_select 0, %s7, %s5
  $region1: #{tpu_custom_call.1} parent=0
    #allocation3 [shape = 'u8[8192]{0}', space=vmem, size = 0x2000, scoped, tag = 'input window, operand 0, single buffered']
    #allocation4 [shape = 's32[1]{0}', space=sflag, size = 0x4, scoped, tag = 'scoped memory for tpu_custom_call.1']
    #allocation5 [shape = 's32[1]{0}', space=sflag, size = 0x4, scoped, tag = 'scoped memory for tpu_custom_call.1']
    #allocation6 [shape = 'u8[8192]{0}', space=vmem, size = 0x2000, scoped, tag = 'input window, operand 1, single buffered']
    #allocation7 [shape = 's32[1]{0}', space=sflag, size = 0x4, scoped, tag = 'scoped memory for tpu_custom_call.1']
    #allocation8 [shape = 'u8[8192]{0}', space=vmem, size = 0x2000, scoped, tag = 'input window, operand 2, single buffered']
    #allocation9 [shape = 'u8[8192]{0}', space=vmem, size = 0x2000, scoped, tag = 'input window, operand 3, single buffered']
    #allocation10 [shape = 's32[1]{0}', space=sflag, size = 0x4, scoped, tag = 'scoped memory for tpu_custom_call.1']
    #allocation11 [shape = 'u8[512]{0}', space=vmem, size = 0x400, scoped, tag = 'output window, operand 0, single buffered']
    %9 = vsyncpa [#allocation4], 0
    %10 = vsyncpa [#allocation7], 0
    %11 = vsyncpa [#allocation10], 0
    %12 = vsyncpa [#allocation5], 0
    // Predicated region
    $region2: #{tpu_custom_call.1} parent=1 // pred_check
      _
    $region3: #{tpu_custom_call.1} parent=1 // pred_check_branch
      %14 = sbr.rel (0) target = $region5
    $region4: #{tpu_custom_call.1} parent=1 // pred_region
      %s15 = sadd.s32 0, 0
      %s17 = ssub.s32 256, 256
      %18 = vsyncadd [#allocation4], %s17
      %s19 = smul.addr %s15, 4
      %s20 = smul.addr %s19, 64
      %s21 = scalar_lea.hbm %s0, %s20
      %s23 = sshll.u32 [#allocation3], 4
      %s24 = int_to_ptr.vmem [resolvable:$true] %s23
      %26 = dma.hbm_to_vmem [thread:$0]  %s21, 256, %s24, [#allocation4]
    $region5: #{tpu_custom_call.1} parent=1 // pred_fallthru
      _
    // Predicated region
    $region6: #{tpu_custom_call.1} parent=1 // pred_check
      _
    $region7: #{tpu_custom_call.1} parent=1 // pred_check_branch
      %28 = sbr.rel (0) target = $region9
    $region8: #{tpu_custom_call.1} parent=1 // pred_region
      %s29 = sadd.s32 0, 0
      %s31 = ssub.s32 256, 256
      %32 = vsyncadd [#allocation7], %s31
      %s33 = smul.addr %s29, 4
      %s34 = smul.addr %s33, 64
      %s35 = scalar_lea.hbm %s1, %s34
      %s37 = sshll.u32 [#allocation6], 4
      %s38 = int_to_ptr.vmem [resolvable:$true] %s37
      %40 = dma.hbm_to_vmem [thread:$0]  %s35, 256, %s38, [#allocation7]
    $region9: #{tpu_custom_call.1} parent=1 // pred_fallthru
      _
    // Predicated region
    $region10: #{tpu_custom_call.1} parent=1 // pred_check
      _
    $region11: #{tpu_custom_call.1} parent=1 // pred_check_branch
      %42 = sbr.rel (0) target = $region13
    $region12: #{tpu_custom_call.1} parent=1 // pred_region
      %s43 = sadd.s32 0, 0
      %s45 = ssub.s32 256, 256
      %46 = vsyncadd [#allocation7], %s45
      %s47 = smul.addr %s43, 4
      %s48 = smul.addr %s47, 64
      %s49 = scalar_lea.hbm %s2, %s48
      %s51 = sshll.u32 [#allocation8], 4
      %s52 = int_to_ptr.vmem [resolvable:$true] %s51
      %54 = dma.hbm_to_vmem [thread:$0]  %s49, 256, %s52, [#allocation7]
    $region13: #{tpu_custom_call.1} parent=1 // pred_fallthru
      _
    // Predicated region
    $region14: #{tpu_custom_call.1} parent=1 // pred_check
      _
    $region15: #{tpu_custom_call.1} parent=1 // pred_check_branch
      %56 = sbr.rel (0) target = $region17
    $region16: #{tpu_custom_call.1} parent=1 // pred_region
      %s57 = sadd.s32 0, 0
      %s59 = ssub.s32 256, 256
      %60 = vsyncadd [#allocation10], %s59
      %s61 = smul.addr %s57, 4
      %s62 = smul.addr %s61, 64
      %s63 = scalar_lea.hbm %s3, %s62
      %s65 = sshll.u32 [#allocation9], 4
      %s66 = int_to_ptr.vmem [resolvable:$true] %s65
      %68 = dma.hbm_to_vmem [thread:$0]  %s63, 256, %s66, [#allocation10]
    $region17: #{tpu_custom_call.1} parent=1 // pred_fallthru
      _
    // Predicated region
    $region18: #{tpu_custom_call.1} parent=1 // pred_check
      _
    $region19: #{tpu_custom_call.1} parent=1 // pred_check_branch
      %70 = sbr.rel (0) target = $region21
    $region20: #{tpu_custom_call.1} parent=1 // pred_region
      %71 = dma.done [#allocation4], 256
    $region21: #{tpu_custom_call.1} parent=1 // pred_fallthru
      _
    // Predicated region
    $region22: #{tpu_custom_call.1} parent=1 // pred_check
      _
    $region23: #{tpu_custom_call.1} parent=1 // pred_check_branch
      %73 = sbr.rel (0) target = $region25
    $region24: #{tpu_custom_call.1} parent=1 // pred_region
      %74 = dma.done [#allocation7], 256
    $region25: #{tpu_custom_call.1} parent=1 // pred_fallthru
      _
    // Predicated region
    $region26: #{tpu_custom_call.1} parent=1 // pred_check
      _
    $region27: #{tpu_custom_call.1} parent=1 // pred_check_branch
      %76 = sbr.rel (0) target = $region29
    $region28: #{tpu_custom_call.1} parent=1 // pred_region
      %77 = dma.done [#allocation7], 256
    $region29: #{tpu_custom_call.1} parent=1 // pred_fallthru
      _
    // Predicated region
    $region30: #{tpu_custom_call.1} parent=1 // pred_check
      _
    $region31: #{tpu_custom_call.1} parent=1 // pred_check_branch
      %79 = sbr.rel (0) target = $region33
    $region32: #{tpu_custom_call.1} parent=1 // pred_region
      %80 = dma.done [#allocation10], 256
    $region33: #{tpu_custom_call.1} parent=1 // pred_fallthru
      _
    %s81 = sadd.s32 0, 0
    %s82 = sadd.s32 0, 0
    %s83 = sadd.s32 0, 0
    %s84 = sadd.s32 0, 0
    %p85 = scmp.eq.s32.totalorder 0, 0
    // Predicated region
    $region34: #{tpu_custom_call.1} parent=1 // pred_check
      %p86 = pneg %p85
    $region35: #{tpu_custom_call.1} parent=1 // pred_check_branch
      %88 = sbr.rel (%p86) target = $region37
    $region36: #{tpu_custom_call.1} parent=1 // pred_region
      %89 = vst [vmem:[#allocation2] sm:$0xff] 0.0
      %90 = vst [vmem:[#allocation2 + $0x8] sm:$0xff] 0.0
    $region37: #{tpu_custom_call.1} parent=1 // pred_fallthru
      _
    %v91 = vld [vmem:[#allocation3] sm:$0xff]
    %v92 = vld [vmem:[#allocation3 + $0x8] sm:$0xff]
    %v93 = vld [vmem:[#allocation6] sm:$0xff]
    %v94 = vld [vmem:[#allocation6 + $0x8] sm:$0xff]
    %v95 = vsub.f32 %v91, %v93
    %v96 = vsub.f32 %v92, %v94
    %v97 = vld [vmem:[#allocation8] sm:$0xff]
    %v98 = vld [vmem:[#allocation8 + $0x8] sm:$0xff]
    %v99 = vsub.f32 %v91, %v97
    %v100 = vsub.f32 %v92, %v98
    %v101 = vld [vmem:[#allocation9] sm:$0xff]
    %v102 = vld [vmem:[#allocation9 + $0x8] sm:$0xff]
    %v103 = vmul.f32 %v95, %v95
    %v104 = vmul.f32 %v96, %v96
    %v105 = vmul.f32 %v103, 0.7
    %v106 = vmul.f32 %v104, 0.7
    %v107 = vmul.f32 %v99, %v99
    %v108 = vmul.f32 %v100, %v100
    %v109 = vmul.f32 %v101, %v107
    %v110 = vmul.f32 %v102, %v108
    %v111 = vmul.f32 %v109, 0.3
    %v112 = vmul.f32 %v110, 0.3
    %v113 = vadd.f32 %v105, %v111
    %v114 = vadd.f32 %v106, %v112
    %v115 = vld [vmem:[#allocation2] sm:$0xff]
    %v116 = vld [vmem:[#allocation2 + $0x8] sm:$0xff]
    %v117 = vadd.f32 %v115, %v113
    %v118 = vadd.f32 %v116, %v114
    %119 = vst [vmem:[#allocation2] sm:$0xff] %v117
    %120 = vst [vmem:[#allocation2 + $0x8] sm:$0xff] %v118
    // Predicated region
    $region38: #{tpu_custom_call.1} parent=1 // pred_check
      %p121 = pneg %p85
    $region39: #{tpu_custom_call.1} parent=1 // pred_check_branch
      %123 = sbr.rel (%p121) target = $region41
    $region40: #{tpu_custom_call.1} parent=1 // pred_region
      %v124 = vld [vmem:[#allocation2] sm:$0xff]
      %v125 = vld [vmem:[#allocation2 + $0x8] sm:$0xff]
      %v128 = vcombine.high %v124, %v124
      %v129 = vcombine.high %v125, %v125
      %vm132 = vcmask 1043456
      %v133 = vsel %vm132, %v124, 0.0
      %v134 = vsel %vm132, %v128, 0.0
      %v135 = vadd.f32 %v133, %v134
      %v136 = vsel %vm132, %v125, 0.0
      %v137 = vadd.f32 %v135, %v136
      %v138 = vsel %vm132, %v129, 0.0
      %v139 = vadd.f32 %v137, %v138
      %140 = vadd.xlane.f32.xlu0 %v139
      %v141 = vpop.xlane.xlu0 %140
      %v142 = vrot.slane %v141, 4
      %v143 = vadd.f32 %v141, %v142
      %v144 = vrot.slane %v143, 2
      %v145 = vadd.f32 %v143, %v144
      %v146 = vrot.slane %v145, 1
      %v147 = vadd.f32 %v145, %v146
      %s148 = vtos %v147
      %s149 = smul.f32 %s148, 0.00048828125
      %v150 = vstv %s149
      %151 = vst [vmem:[#allocation11] sm:$0x1] %v150
    $region41: #{tpu_custom_call.1} parent=1 // pred_fallthru
      _
    // Predicated region
    $region42: #{tpu_custom_call.1} parent=1 // pred_check
      _
    $region43: #{tpu_custom_call.1} parent=1 // pred_check_branch
      %153 = sbr.rel (0) target = $region45
    $region44: #{tpu_custom_call.1} parent=1 // pred_region
      %s155 = ssub.s32 16, 16
      %156 = vsyncadd [#allocation5], %s155
      %s158 = sshll.u32 [#allocation11], 4
      %s159 = int_to_ptr.vmem [resolvable:$true] %s158
      %161 = dma.vmem_to_hbm [thread:$0]  %s159, 16, %s4, [#allocation5]
    $region45: #{tpu_custom_call.1} parent=1 // pred_fallthru
      _
    // Predicated region
    $region46: #{tpu_custom_call.1} parent=1 // pred_check
      _
    $region47: #{tpu_custom_call.1} parent=1 // pred_check_branch
      %163 = sbr.rel (0) target = $region49
    $region48: #{tpu_custom_call.1} parent=1 // pred_region
      %164 = dma.done [#allocation5], 16
    $region49: #{tpu_custom_call.1} parent=1 // pred_fallthru
      _
    %165 = vsyncpa [#allocation4], 1
    %166 = vsyncpa [#allocation7], 1
    %167 = vsyncpa [#allocation10], 1
    %168 = vsyncpa [#allocation5], 1

</llo_original>
